<compile_context>
chip_gen: v5e
topology: v5e:2x2
jax: 0.10.0
libtpu: 0.0.40
codegen_flags: <defaults>
</compile_context>

<pallas_src>
import functools

import jax
import jax.numpy as jnp
import numpy as np
from jax.experimental import pallas as pl
from jax.experimental.pallas import tpu as pltpu


def _pick_batch_block(batch):
    """Batch elements folded into one grid step.

    Chosen so the (block_b, ...) output blocks respect the (8,128) rule:
    either block_b == batch (full dim) or block_b is a multiple of 8.
    """
    if batch <= 8:
        return batch
    for bb in (32, 24, 16, 8):
        if batch % bb == 0:
            return bb
    return batch


def _pick_src_chunk(tgt_len, src_len, ctx_dim, budget_bytes=2 << 20):
    """Largest divisor of src_len whose (tgt, chunk, ctx) f32 tanh tile fits the budget.

    Bounds the transient score tile so it never blows VMEM (v7x: 64 MiB
    physical, 32 MiB default scoped VMEM).  Re-derive the budget per chip
    generation if needed.
    """
    bytes_per_col = max(1, tgt_len * ctx_dim * 4)
    cap = max(1, budget_bytes // bytes_per_col)
    if src_len <= cap:
        return src_len
    best = 1
    for d in range(1, src_len + 1):
        if src_len % d == 0 and d <= cap:
            best = d
    return best


def _attention_kernel(lens_ref,                        # scalar prefetch (SMEM)
                      src_ref, mrgd_ref,               # per-batch-block data
                      wqT_ref, bq_ref, wcT_ref, v_ref,  # weights (grid-invariant)
                      c_ref, align_ref,                # outputs
                      *, ctx_dim, src_chunk, compute_dtype):
    bidx = pl.program_id(0)
    block_b, tgt_len, q_dim = src_ref.shape
    _, src_len, _ = mrgd_ref.shape
    n_chunks = src_len // src_chunk

    v_row = v_ref[...]                                  # (1, ctx)
    bq = bq_ref[...]                                    # (1, ctx)

    # Query projection for all block_b*tgt_len rows in a single MXU pass.
    batched_query = (block_b == 1) or (tgt_len % 8 == 0)
    if batched_query:
        src2d = src_ref[...].reshape(block_b * tgt_len, q_dim)
        wq_all = jnp.dot(src2d, wqT_ref[...],
                         preferred_element_type=jnp.float32) + bq

    for i in range(block_b):                            # static unroll over batch elems
        if batched_query:
            wq_b = wq_all[i * tgt_len:(i + 1) * tgt_len, :]
        else:
            wq_b = jnp.dot(src_ref[i], wqT_ref[...],
                           preferred_element_type=jnp.float32) + bq
        wq_b = wq_b.astype(compute_dtype)               # (tgt, ctx), hoisted

        # score(t, j) = v . tanh(wq[t] + uh[j]), streamed over src chunks so only a
        # (tgt, chunk, ctx) tile is ever materialized.  Raw scores land in the
        # resident align output block and are normalized afterwards.
        for cj in range(n_chunks):                      # static unroll (static lane offsets)
            j0 = cj * src_chunk
            mrgd_c = mrgd_ref[i, j0:j0 + src_chunk, :]  # (chunk, ctx+sfd)
            uh_c = jnp.dot(mrgd_c, wcT_ref[...],
                           preferred_element_type=jnp.float32)          # (chunk, ctx) MXU
            wquh = jnp.tanh(wq_b[:, None, :]
                            + uh_c.astype(compute_dtype)[None, :, :])   # (tgt, chunk, ctx) EUP
            s_c = jnp.sum(wquh.astype(jnp.float32) * v_row, axis=-1)    # (tgt, chunk)
            align_ref[i, :, j0:j0 + src_chunk] = s_c

        # Length mask + softmax over the full src axis.
        scores = align_ref[i]                           # (tgt, src)
        col = jax.lax.broadcasted_iota(jnp.int32, (tgt_len, src_len), 1)
        valid = col < lens_ref[bidx * block_b + i]
        scores = jnp.where(valid, scores, -jnp.inf)
        m = jnp.max(scores, axis=-1, keepdims=True)
        e = jnp.exp(scores - jnp.maximum(m, jnp.float32(-1e30)))
        denom = jnp.sum(e, axis=-1, keepdims=True)
        # Guard all-masked rows (memory_lengths == 0): zeros instead of NaNs.
        align_b = e / jnp.where(denom > 0.0, denom, jnp.float32(1.0))
        align_ref[i] = align_b

        # Context vector: c = align @ memory_bank (first ctx_dim lanes of mrgd).
        mem_b = mrgd_ref[i, :, :ctx_dim]                # (src, ctx)
        c_ref[i] = jnp.dot(align_b, mem_b,
                           preferred_element_type=jnp.float32).astype(c_ref.dtype)


def global_attention_plus(source, memory_bank, score_feats, memory_lengths,
                          wq, bq, wc, v, *,
                          compute_dtype=jnp.float32, batch_major=False,
                          src_chunk=None):
    """Pallas implementation of GlobalAttentionPlus.forward (mlp / softmax).

    wq: (ctx_dim, q_dim)                      linear_query.weight
    bq: (ctx_dim,)                            linear_query.bias
    wc: (ctx_dim, ctx_dim + score_feat_dim)   linear_context.weight
    v : (1, ctx_dim)                          v.weight

    compute_dtype: set jnp.bfloat16 on v6e/v7x to double EUP tanh throughput
      (revalidate tolerances); keep f32 on v5e.
    batch_major: return (batch, tgt, ...) and skip the layout transposes.
    Default (multi-step) return: (tgt_len, batch, ctx_dim), (tgt_len, batch, src_len).
    """
    one_step = source.ndim == 2
    if one_step:
        source = source[:, None, :]

    batch, tgt_len, q_dim = source.shape
    _, src_len, ctx_dim = memory_bank.shape

    # Lane-dense merged context operand: single wide-K context matmul.
    if score_feats is not None:
        mrgd = jnp.concatenate([memory_bank, score_feats], axis=-1)
    else:
        mrgd = memory_bank
    mrgd_dim = mrgd.shape[-1]

    wqT = wq.T                        # (q_dim, ctx)
    bq2 = bq.reshape(1, ctx_dim)      # (1, ctx)
    wcT = wc.T                        # (ctx+sfd, ctx)
    v2 = v.reshape(1, ctx_dim)        # (1, ctx)

    block_b = _pick_batch_block(batch)
    if src_chunk is None or src_len % src_chunk != 0:
        src_chunk = _pick_src_chunk(tgt_len, src_len, ctx_dim)

    lens = jnp.asarray(memory_lengths, jnp.int32)

    kernel = functools.partial(_attention_kernel, ctx_dim=ctx_dim,
                               src_chunk=src_chunk, compute_dtype=compute_dtype)

    grid_spec = pltpu.PrefetchScalarGridSpec(
        num_scalar_prefetch=1,
        grid=(batch // block_b,),
        in_specs=[
            pl.BlockSpec((block_b, tgt_len, q_dim), lambda b, lens_ref: (b, 0, 0)),
            pl.BlockSpec((block_b, src_len, mrgd_dim), lambda b, lens_ref: (b, 0, 0)),
            pl.BlockSpec((q_dim, ctx_dim), lambda b, lens_ref: (0, 0)),
            pl.BlockSpec((1, ctx_dim), lambda b, lens_ref: (0, 0)),
            pl.BlockSpec((mrgd_dim, ctx_dim), lambda b, lens_ref: (0, 0)),
            pl.BlockSpec((1, ctx_dim), lambda b, lens_ref: (0, 0)),
        ],
        out_specs=[
            pl.BlockSpec((block_b, tgt_len, ctx_dim), lambda b, lens_ref: (b, 0, 0)),
            pl.BlockSpec((block_b, tgt_len, src_len), lambda b, lens_ref: (b, 0, 0)),
        ],
    )

    c_bt, align_bt = pl.pallas_call(
        kernel,
        grid_spec=grid_spec,
        out_shape=(
            jax.ShapeDtypeStruct((batch, tgt_len, ctx_dim), jnp.float32),
            jax.ShapeDtypeStruct((batch, tgt_len, src_len), jnp.float32),
        ),
        compiler_params=pltpu.CompilerParams(
            dimension_semantics=("parallel",)),
    )(lens, source, mrgd, wqT, bq2, wcT, v2)

    if one_step:
        return c_bt[:, 0, :], align_bt[:, 0, :]
    if batch_major:
        # Consumers that accept (batch, tgt, ...) avoid an extra HBM round trip.
        return c_bt, align_bt
    # PyTorch multi-step convention: (tgt_len, batch, ...).
    # TODO(synk): writing (tgt, batch, ...) directly from the kernel needs strided
    # middle-dim stores; kept in the wrapper for lowering robustness.
    return jnp.swapaxes(c_bt, 0, 1), jnp.swapaxes(align_bt, 0, 1)


def _reference(source, memory_bank, score_feats, memory_lengths, wq, bq, wc, v):
    # Pure-JAX reference mirroring the PyTorch forward (mlp / softmax).
    wq_t = source @ wq.T + bq                                    # (b, t, ctx)
    mrgd = jnp.concatenate([memory_bank, score_feats], axis=-1)  # (b, s, ctx+sfd)
    uh = mrgd @ wc.T                                             # (b, s, ctx)
    wquh = jnp.tanh(wq_t[:, :, None, :] + uh[:, None, :, :])     # (b, t, s, ctx)
    align = jnp.einsum('btsc,c->bts', wquh, v.reshape(-1))
    src_len = memory_bank.shape[1]
    mask = jnp.arange(src_len)[None, None, :] < memory_lengths[:, None, None]
    align = jnp.where(mask, align, -jnp.inf)
    av = jax.nn.softmax(align, axis=-1)
    c = jnp.einsum('bts,bsc->btc', av, memory_bank)
    return c.transpose(1, 0, 2), av.transpose(1, 0, 2)


if __name__ == "__main__":
    batch, tgt_len, src_len = 2, 8, 8
    q_dim, ctx_dim, sfd = 32, 32, 8

    key = jax.random.PRNGKey(0)
    ks = jax.random.split(key, 8)
    source = jax.random.normal(ks[0], (batch, tgt_len, q_dim), jnp.float32)
    memory_bank = jax.random.normal(ks[1], (batch, src_len, ctx_dim), jnp.float32)
    score_feats = jax.random.normal(ks[2], (batch, src_len, sfd), jnp.float32)
    memory_lengths = jnp.array([8, 5], dtype=jnp.int32)

    # Deterministic parameter init (linear_query, linear_context, v).
    wq = 0.1 * jax.random.normal(ks[3], (ctx_dim, q_dim), jnp.float32)
    bq = 0.1 * jax.random.normal(ks[4], (ctx_dim,), jnp.float32)
    wc = 0.1 * jax.random.normal(ks[5], (ctx_dim, ctx_dim + sfd), jnp.float32)
    v = 0.1 * jax.random.normal(ks[6], (1, ctx_dim), jnp.float32)

    c, align = global_attention_plus(source, memory_bank, score_feats,
                                     memory_lengths, wq, bq, wc, v)
    jax.block_until_ready((c, align))

    c_ref, align_ref = _reference(source, memory_bank, score_feats,
                                  memory_lengths, wq, bq, wc, v)
    np.testing.assert_allclose(np.asarray(c), np.asarray(c_ref), rtol=1e-4, atol=1e-5)
    np.testing.assert_allclose(np.asarray(align), np.asarray(align_ref),
                               rtol=1e-4, atol=1e-5)

    print("KERNEL_OK")
</pallas_src>

<mosaic_0001>
module attributes {stable_mosaic.version = 11 : i64} {
  func.func @_attention_kernel(%arg0: i32, %arg1: memref<2xi32, #tpu.memory_space<smem>>, %arg2: memref<2x8x32xf32, #tpu.memory_space<vmem>>, %arg3: memref<2x8x40xf32, #tpu.memory_space<vmem>>, %arg4: memref<32x32xf32, #tpu.memory_space<vmem>>, %arg5: memref<1x32xf32, #tpu.memory_space<vmem>>, %arg6: memref<40x32xf32, #tpu.memory_space<vmem>>, %arg7: memref<1x32xf32, #tpu.memory_space<vmem>>, %arg8: memref<2x8x32xf32, #tpu.memory_space<vmem>>, %arg9: memref<2x8x8xf32, #tpu.memory_space<vmem>>) attributes {dimension_semantics = [#tpu.dimension_semantics<parallel>], iteration_bounds = array<i64: 1>, scalar_prefetch = 1 : i64, scratch_operands = 0 : i64, tpu.core_type = #tpu.core_type<tc>, window_params = [{transform_indices = @transform_0, window_bounds = array<i64: 2, 8, 32>}, {transform_indices = @transform_1, window_bounds = array<i64: 2, 8, 40>}, {pipeline_mode = #tpu.pipeline_mode<synchronous>, transform_indices = @transform_2, window_bounds = array<i64: 32, 32>}, {pipeline_mode = #tpu.pipeline_mode<synchronous>, transform_indices = @transform_3, window_bounds = array<i64: 1, 32>}, {pipeline_mode = #tpu.pipeline_mode<synchronous>, transform_indices = @transform_4, window_bounds = array<i64: 40, 32>}, {pipeline_mode = #tpu.pipeline_mode<synchronous>, transform_indices = @transform_5, window_bounds = array<i64: 1, 32>}, {transform_indices = @transform_6, window_bounds = array<i64: 2, 8, 32>}, {transform_indices = @transform_7, window_bounds = array<i64: 2, 8, 8>}]} {
    %c0 = arith.constant 0 : index
    %c0_0 = arith.constant 0 : index
    %0 = vector.load %arg7[%c0, %c0_0] : memref<1x32xf32, #tpu.memory_space<vmem>>, vector<1x32xf32>
    %c0_1 = arith.constant 0 : index
    %c0_2 = arith.constant 0 : index
    %1 = vector.load %arg5[%c0_1, %c0_2] : memref<1x32xf32, #tpu.memory_space<vmem>>, vector<1x32xf32>
    %c0_3 = arith.constant 0 : index
    %c0_4 = arith.constant 0 : index
    %c0_5 = arith.constant 0 : index
    %2 = vector.load %arg2[%c0_3, %c0_4, %c0_5] : memref<2x8x32xf32, #tpu.memory_space<vmem>>, vector<2x8x32xf32>
    %3 = vector.shape_cast %2 : vector<2x8x32xf32> to vector<16x32xf32>
    %c0_6 = arith.constant 0 : index
    %c0_7 = arith.constant 0 : index
    %4 = vector.load %arg4[%c0_6, %c0_7] : memref<32x32xf32, #tpu.memory_space<vmem>>, vector<32x32xf32>
    %cst = arith.constant dense<0.000000e+00> : vector<16x32xf32>
    %5 = tpu.matmul %3, %4, %cst {dimension_numbers = #tpu.dot_dimension_numbers<[1], [0], [0], [1], [0, 0, 1, 1], [], []>} : vector<16x32xf32>, vector<32x32xf32>, vector<16x32xf32> -> vector<16x32xf32>
    %6 = vector.broadcast %1 : vector<1x32xf32> to vector<16x32xf32>
    %7 = arith.addf %5, %6 : vector<16x32xf32>
    %8 = vector.extract_strided_slice %7 {offsets = [0, 0], sizes = [8, 32], strides = [1, 1]} : vector<16x32xf32> to vector<8x32xf32>
    %c0_8 = arith.constant 0 : index
    %c0_9 = arith.constant 0 : index
    %c0_10 = arith.constant 0 : index
    %9 = vector.load %arg3[%c0_8, %c0_9, %c0_10] : memref<2x8x40xf32, #tpu.memory_space<vmem>>, vector<1x8x40xf32>
    %10 = vector.shape_cast %9 : vector<1x8x40xf32> to vector<8x40xf32>
    %c0_11 = arith.constant 0 : index
    %c0_12 = arith.constant 0 : index
    %11 = vector.load %arg6[%c0_11, %c0_12] : memref<40x32xf32, #tpu.memory_space<vmem>>, vector<40x32xf32>
    %cst_13 = arith.constant dense<0.000000e+00> : vector<8x32xf32>
    %12 = tpu.matmul %10, %11, %cst_13 {dimension_numbers = #tpu.dot_dimension_numbers<[1], [0], [0], [1], [0, 0, 1, 1], [], []>} : vector<8x40xf32>, vector<40x32xf32>, vector<8x32xf32> -> vector<8x32xf32>
    %13 = vector.shape_cast %8 : vector<8x32xf32> to vector<8x1x32xf32>
    %14 = vector.shape_cast %12 : vector<8x32xf32> to vector<1x8x32xf32>
    %15 = vector.broadcast %13 : vector<8x1x32xf32> to vector<8x8x32xf32>
    %16 = vector.broadcast %14 : vector<1x8x32xf32> to vector<8x8x32xf32>
    %17 = arith.addf %15, %16 : vector<8x8x32xf32>
    %18 = math.tanh %17 : vector<8x8x32xf32>
    %19 = vector.shape_cast %0 : vector<1x32xf32> to vector<1x1x32xf32>
    %20 = vector.broadcast %19 : vector<1x1x32xf32> to vector<8x8x32xf32>
    %21 = arith.mulf %18, %20 : vector<8x8x32xf32>
    %cst_14 = arith.constant dense<0.000000e+00> : vector<8x8xf32>
    %22 = vector.multi_reduction <add>, %21, %cst_14 [2] : vector<8x8x32xf32> to vector<8x8xf32>
    %c0_15 = arith.constant 0 : index
    %c0_16 = arith.constant 0 : index
    %c0_17 = arith.constant 0 : index
    %23 = vector.load %arg9[%c0_15, %c0_16, %c0_17] : memref<2x8x8xf32, #tpu.memory_space<vmem>>, vector<1x8x8xf32>
    %24 = vector.shape_cast %23 : vector<1x8x8xf32> to vector<8x8xf32>
    %25 = vector.shape_cast %22 : vector<8x8xf32> to vector<1x8x8xf32>
    tpu.vector_store %arg9[%c0_15, %c0_16, %c0_17], %25 {strides = array<i32>} : memref<2x8x8xf32, #tpu.memory_space<vmem>>, vector<1x8x8xf32>,
    %c0_18 = arith.constant 0 : index
    %c0_19 = arith.constant 0 : index
    %c0_20 = arith.constant 0 : index
    %26 = vector.load %arg9[%c0_18, %c0_19, %c0_20] : memref<2x8x8xf32, #tpu.memory_space<vmem>>, vector<1x8x8xf32>
    %27 = vector.shape_cast %26 : vector<1x8x8xf32> to vector<8x8xf32>
    %28 = tpu.iota {dimensions = array<i32: 1>} : vector<8x8xi32>
    %c2_i32 = arith.constant 2 : i32
    %29 = arith.muli %arg0, %c2_i32 : i32
    %c0_i32 = arith.constant 0 : i32
    %30 = arith.addi %29, %c0_i32 : i32
    %31 = arith.index_cast %30 : i32 to index
    %32 = memref.load %arg1[%31] : memref<2xi32, #tpu.memory_space<smem>>
    %33 = vector.broadcast %32 : i32 to vector<8x8xi32>
    %34 = arith.cmpi slt, %28, %33 : vector<8x8xi32>
    %cst_21 = arith.constant 0xFF800000 : f32
    %35 = vector.broadcast %cst_21 : f32 to vector<8x8xf32>
    %36 = arith.select %34, %27, %35 : vector<8x8xi1>, vector<8x8xf32>
    %cst_22 = arith.constant dense<0xFF800000> : vector<8xf32>
    %37 = vector.multi_reduction <maximumf>, %36, %cst_22 [1] : vector<8x8xf32> to vector<8xf32>
    %38 = vector.shape_cast %37 : vector<8xf32> to vector<8x1xf32>
    %cst_23 = arith.constant -1.000000e+30 : f32
    %39 = vector.broadcast %cst_23 : f32 to vector<8x1xf32>
    %40 = arith.maximumf %38, %39 : vector<8x1xf32>
    %41 = vector.broadcast %40 : vector<8x1xf32> to vector<8x8xf32>
    %42 = arith.subf %36, %41 : vector<8x8xf32>
    %43 = math.exp %42 : vector<8x8xf32>
    %cst_24 = arith.constant dense<0.000000e+00> : vector<8xf32>
    %44 = vector.multi_reduction <add>, %43, %cst_24 [1] : vector<8x8xf32> to vector<8xf32>
    %45 = vector.shape_cast %44 : vector<8xf32> to vector<8x1xf32>
    %cst_25 = arith.constant 0.000000e+00 : f32
    %46 = vector.broadcast %cst_25 : f32 to vector<8x1xf32>
    %47 = arith.cmpf ogt, %45, %46 : vector<8x1xf32>
    %cst_26 = arith.constant 1.000000e+00 : f32
    %48 = vector.broadcast %cst_26 : f32 to vector<8x1xf32>
    %49 = arith.select %47, %45, %48 : vector<8x1xi1>, vector<8x1xf32>
    %50 = vector.broadcast %49 : vector<8x1xf32> to vector<8x8xf32>
    %51 = arith.divf %43, %50 : vector<8x8xf32>
    %c0_27 = arith.constant 0 : index
    %c0_28 = arith.constant 0 : index
    %c0_29 = arith.constant 0 : index
    %52 = vector.load %arg9[%c0_27, %c0_28, %c0_29] : memref<2x8x8xf32, #tpu.memory_space<vmem>>, vector<1x8x8xf32>
    %53 = vector.shape_cast %52 : vector<1x8x8xf32> to vector<8x8xf32>
    %54 = vector.shape_cast %51 : vector<8x8xf32> to vector<1x8x8xf32>
    tpu.vector_store %arg9[%c0_27, %c0_28, %c0_29], %54 {strides = array<i32>} : memref<2x8x8xf32, #tpu.memory_space<vmem>>, vector<1x8x8xf32>,
    %c0_30 = arith.constant 0 : index
    %c0_31 = arith.constant 0 : index
    %c0_32 = arith.constant 0 : index
    %55 = vector.load %arg3[%c0_30, %c0_31, %c0_32] : memref<2x8x40xf32, #tpu.memory_space<vmem>>, vector<1x8x32xf32>
    %56 = vector.shape_cast %55 : vector<1x8x32xf32> to vector<8x32xf32>
    %cst_33 = arith.constant dense<0.000000e+00> : vector<8x32xf32>
    %57 = tpu.matmul %51, %56, %cst_33 {dimension_numbers = #tpu.dot_dimension_numbers<[1], [0], [0], [1], [0, 0, 1, 1], [], []>} : vector<8x8xf32>, vector<8x32xf32>, vector<8x32xf32> -> vector<8x32xf32>
    %c0_34 = arith.constant 0 : index
    %c0_35 = arith.constant 0 : index
    %c0_36 = arith.constant 0 : index
    %58 = vector.load %arg8[%c0_34, %c0_35, %c0_36] : memref<2x8x32xf32, #tpu.memory_space<vmem>>, vector<1x8x32xf32>
    %59 = vector.shape_cast %58 : vector<1x8x32xf32> to vector<8x32xf32>
    %60 = vector.shape_cast %57 : vector<8x32xf32> to vector<1x8x32xf32>
    tpu.vector_store %arg8[%c0_34, %c0_35, %c0_36], %60 {strides = array<i32>} : memref<2x8x32xf32, #tpu.memory_space<vmem>>, vector<1x8x32xf32>,
    %61 = vector.extract_strided_slice %7 {offsets = [8, 0], sizes = [8, 32], strides = [1, 1]} : vector<16x32xf32> to vector<8x32xf32>
    %c1 = arith.constant 1 : index
    %c0_37 = arith.constant 0 : index
    %c0_38 = arith.constant 0 : index
    %62 = vector.load %arg3[%c1, %c0_37, %c0_38] : memref<2x8x40xf32, #tpu.memory_space<vmem>>, vector<1x8x40xf32>
    %63 = vector.shape_cast %62 : vector<1x8x40xf32> to vector<8x40xf32>
    %c0_39 = arith.constant 0 : index
    %c0_40 = arith.constant 0 : index
    %64 = vector.load %arg6[%c0_39, %c0_40] : memref<40x32xf32, #tpu.memory_space<vmem>>, vector<40x32xf32>
    %cst_41 = arith.constant dense<0.000000e+00> : vector<8x32xf32>
    %65 = tpu.matmul %63, %64, %cst_41 {dimension_numbers = #tpu.dot_dimension_numbers<[1], [0], [0], [1], [0, 0, 1, 1], [], []>} : vector<8x40xf32>, vector<40x32xf32>, vector<8x32xf32> -> vector<8x32xf32>
    %66 = vector.shape_cast %61 : vector<8x32xf32> to vector<8x1x32xf32>
    %67 = vector.shape_cast %65 : vector<8x32xf32> to vector<1x8x32xf32>
    %68 = vector.broadcast %66 : vector<8x1x32xf32> to vector<8x8x32xf32>
    %69 = vector.broadcast %67 : vector<1x8x32xf32> to vector<8x8x32xf32>
    %70 = arith.addf %68, %69 : vector<8x8x32xf32>
    %71 = math.tanh %70 : vector<8x8x32xf32>
    %72 = vector.shape_cast %0 : vector<1x32xf32> to vector<1x1x32xf32>
    %73 = vector.broadcast %72 : vector<1x1x32xf32> to vector<8x8x32xf32>
    %74 = arith.mulf %71, %73 : vector<8x8x32xf32>
    %cst_42 = arith.constant dense<0.000000e+00> : vector<8x8xf32>
    %75 = vector.multi_reduction <add>, %74, %cst_42 [2] : vector<8x8x32xf32> to vector<8x8xf32>
    %c1_43 = arith.constant 1 : index
    %c0_44 = arith.constant 0 : index
    %c0_45 = arith.constant 0 : index
    %76 = vector.load %arg9[%c1_43, %c0_44, %c0_45] : memref<2x8x8xf32, #tpu.memory_space<vmem>>, vector<1x8x8xf32>
    %77 = vector.shape_cast %76 : vector<1x8x8xf32> to vector<8x8xf32>
    %78 = vector.shape_cast %75 : vector<8x8xf32> to vector<1x8x8xf32>
    tpu.vector_store %arg9[%c1_43, %c0_44, %c0_45], %78 {strides = array<i32>} : memref<2x8x8xf32, #tpu.memory_space<vmem>>, vector<1x8x8xf32>,
    %c1_46 = arith.constant 1 : index
    %c0_47 = arith.constant 0 : index
    %c0_48 = arith.constant 0 : index
    %79 = vector.load %arg9[%c1_46, %c0_47, %c0_48] : memref<2x8x8xf32, #tpu.memory_space<vmem>>, vector<1x8x8xf32>
    %80 = vector.shape_cast %79 : vector<1x8x8xf32> to vector<8x8xf32>
    %81 = tpu.iota {dimensions = array<i32: 1>} : vector<8x8xi32>
    %c2_i32_49 = arith.constant 2 : i32
    %82 = arith.muli %arg0, %c2_i32_49 : i32
    %c1_i32 = arith.constant 1 : i32
    %83 = arith.addi %82, %c1_i32 : i32
    %84 = arith.index_cast %83 : i32 to index
    %85 = memref.load %arg1[%84] : memref<2xi32, #tpu.memory_space<smem>>
    %86 = vector.broadcast %85 : i32 to vector<8x8xi32>
    %87 = arith.cmpi slt, %81, %86 : vector<8x8xi32>
    %cst_50 = arith.constant 0xFF800000 : f32
    %88 = vector.broadcast %cst_50 : f32 to vector<8x8xf32>
    %89 = arith.select %87, %80, %88 : vector<8x8xi1>, vector<8x8xf32>
    %cst_51 = arith.constant dense<0xFF800000> : vector<8xf32>
    %90 = vector.multi_reduction <maximumf>, %89, %cst_51 [1] : vector<8x8xf32> to vector<8xf32>
    %91 = vector.shape_cast %90 : vector<8xf32> to vector<8x1xf32>
    %cst_52 = arith.constant -1.000000e+30 : f32
    %92 = vector.broadcast %cst_52 : f32 to vector<8x1xf32>
    %93 = arith.maximumf %91, %92 : vector<8x1xf32>
    %94 = vector.broadcast %93 : vector<8x1xf32> to vector<8x8xf32>
    %95 = arith.subf %89, %94 : vector<8x8xf32>
    %96 = math.exp %95 : vector<8x8xf32>
    %cst_53 = arith.constant dense<0.000000e+00> : vector<8xf32>
    %97 = vector.multi_reduction <add>, %96, %cst_53 [1] : vector<8x8xf32> to vector<8xf32>
    %98 = vector.shape_cast %97 : vector<8xf32> to vector<8x1xf32>
    %cst_54 = arith.constant 0.000000e+00 : f32
    %99 = vector.broadcast %cst_54 : f32 to vector<8x1xf32>
    %100 = arith.cmpf ogt, %98, %99 : vector<8x1xf32>
    %cst_55 = arith.constant 1.000000e+00 : f32
    %101 = vector.broadcast %cst_55 : f32 to vector<8x1xf32>
    %102 = arith.select %100, %98, %101 : vector<8x1xi1>, vector<8x1xf32>
    %103 = vector.broadcast %102 : vector<8x1xf32> to vector<8x8xf32>
    %104 = arith.divf %96, %103 : vector<8x8xf32>
    %c1_56 = arith.constant 1 : index
    %c0_57 = arith.constant 0 : index
    %c0_58 = arith.constant 0 : index
    %105 = vector.load %arg9[%c1_56, %c0_57, %c0_58] : memref<2x8x8xf32, #tpu.memory_space<vmem>>, vector<1x8x8xf32>
    %106 = vector.shape_cast %105 : vector<1x8x8xf32> to vector<8x8xf32>
    %107 = vector.shape_cast %104 : vector<8x8xf32> to vector<1x8x8xf32>
    tpu.vector_store %arg9[%c1_56, %c0_57, %c0_58], %107 {strides = array<i32>} : memref<2x8x8xf32, #tpu.memory_space<vmem>>, vector<1x8x8xf32>,
    %c1_59 = arith.constant 1 : index
    %c0_60 = arith.constant 0 : index
    %c0_61 = arith.constant 0 : index
    %108 = vector.load %arg3[%c1_59, %c0_60, %c0_61] : memref<2x8x40xf32, #tpu.memory_space<vmem>>, vector<1x8x32xf32>
    %109 = vector.shape_cast %108 : vector<1x8x32xf32> to vector<8x32xf32>
    %cst_62 = arith.constant dense<0.000000e+00> : vector<8x32xf32>
    %110 = tpu.matmul %104, %109, %cst_62 {dimension_numbers = #tpu.dot_dimension_numbers<[1], [0], [0], [1], [0, 0, 1, 1], [], []>} : vector<8x8xf32>, vector<8x32xf32>, vector<8x32xf32> -> vector<8x32xf32>
    %c1_63 = arith.constant 1 : index
    %c0_64 = arith.constant 0 : index
    %c0_65 = arith.constant 0 : index
    %111 = vector.load %arg8[%c1_63, %c0_64, %c0_65] : memref<2x8x32xf32, #tpu.memory_space<vmem>>, vector<1x8x32xf32>
    %112 = vector.shape_cast %111 : vector<1x8x32xf32> to vector<8x32xf32>
    %113 = vector.shape_cast %110 : vector<8x32xf32> to vector<1x8x32xf32>
    tpu.vector_store %arg8[%c1_63, %c0_64, %c0_65], %113 {strides = array<i32>} : memref<2x8x32xf32, #tpu.memory_space<vmem>>, vector<1x8x32xf32>,
    return
  }
  func.func @transform_0(%arg0: i32, %arg1: memref<2xi32, #tpu.memory_space<smem>>) -> (i32, i32, i32) {
    %c0_i32 = arith.constant 0 : i32
    %c0_i32_0 = arith.constant 0 : i32
    %c0_i32_1 = arith.constant 0 : i32
    return %arg0, %c0_i32, %c0_i32_0 : i32, i32, i32
  }
  func.func @transform_1(%arg0: i32, %arg1: memref<2xi32, #tpu.memory_space<smem>>) -> (i32, i32, i32) {
    %c0_i32 = arith.constant 0 : i32
    %c0_i32_0 = arith.constant 0 : i32
    %c0_i32_1 = arith.constant 0 : i32
    return %arg0, %c0_i32, %c0_i32_0 : i32, i32, i32
  }
  func.func @transform_2(%arg0: i32, %arg1: memref<2xi32, #tpu.memory_space<smem>>) -> (i32, i32) {
    %c0_i32 = arith.constant 0 : i32
    %c0_i32_0 = arith.constant 0 : i32
    %c0_i32_1 = arith.constant 0 : i32
    return %c0_i32, %c0_i32_0 : i32, i32
  }
  func.func @transform_3(%arg0: i32, %arg1: memref<2xi32, #tpu.memory_space<smem>>) -> (i32, i32) {
    %c0_i32 = arith.constant 0 : i32
    %c0_i32_0 = arith.constant 0 : i32
    %c0_i32_1 = arith.constant 0 : i32
    return %c0_i32, %c0_i32_0 : i32, i32
  }
  func.func @transform_4(%arg0: i32, %arg1: memref<2xi32, #tpu.memory_space<smem>>) -> (i32, i32) {
    %c0_i32 = arith.constant 0 : i32
    %c0_i32_0 = arith.constant 0 : i32
    %c0_i32_1 = arith.constant 0 : i32
    return %c0_i32, %c0_i32_0 : i32, i32
  }
  func.func @transform_5(%arg0: i32, %arg1: memref<2xi32, #tpu.memory_space<smem>>) -> (i32, i32) {
    %c0_i32 = arith.constant 0 : i32
    %c0_i32_0 = arith.constant 0 : i32
    %c0_i32_1 = arith.constant 0 : i32
    return %c0_i32, %c0_i32_0 : i32, i32
  }
  func.func @transform_6(%arg0: i32, %arg1: memref<2xi32, #tpu.memory_space<smem>>) -> (i32, i32, i32) {
    %c0_i32 = arith.constant 0 : i32
    %c0_i32_0 = arith.constant 0 : i32
    %c0_i32_1 = arith.constant 0 : i32
    return %arg0, %c0_i32, %c0_i32_0 : i32, i32, i32
  }
  func.func @transform_7(%arg0: i32, %arg1: memref<2xi32, #tpu.memory_space<smem>>) -> (i32, i32, i32) {
    %c0_i32 = arith.constant 0 : i32
    %c0_i32_0 = arith.constant 0 : i32
    %c0_i32_1 = arith.constant 0 : i32
    return %arg0, %c0_i32, %c0_i32_0 : i32, i32, i32
  }
}

</mosaic_0001>

<llo_original>
// kernel: tpu_custom_call.1
$region0: #{tpu_custom_call.1}
  #allocation0 [shape = 'u32[]', space=smem, size = 0x4, offset = 0x4, fixed_abs, tag = 'smem constant byte address 0x4 - core index']
  #allocation1 [shape = 'u32[72,128]{1,0:T(1,128)}', space=vmem, size = 0x9000, scoped, tag = 'internal scratch']
  #allocation2 [shape = 's32[1]{0}', space=sflag, size = 0x4, scoped, tag = 'scoped memory for tpu_custom_call.1']
  #allocation3 [shape = 'u8[512]{0}', space=smem, size = 0x200, scoped, tag = 'prefetched SMEM operand 0']
  %s0 = inlined_call_operand.vmem [shape: s32[2], index: 0, kind: input, shape index: {}]
  %s1 = inlined_call_operand.vmem [shape: f32[2,8,32], index: 1, kind: input, shape index: {}]
  %s2 = inlined_call_operand.vmem [shape: f32[2,8,40], index: 2, kind: input, shape index: {}]
  %s3 = inlined_call_operand.vmem [shape: f32[32,32], index: 3, kind: input, shape index: {}]
  %s4 = inlined_call_operand.vmem [shape: f32[1,32], index: 4, kind: input, shape index: {}]
  %s5 = inlined_call_operand.vmem [shape: f32[40,32], index: 5, kind: input, shape index: {}]
  %s6 = inlined_call_operand.vmem [shape: f32[1,32], index: 6, kind: input, shape index: {}]
  %s7 = inlined_call_operand.hbm [shape: f32[2,8,32], index: 7, kind: output, shape index: {0}]
  %s8 = inlined_call_operand.hbm [shape: f32[2,8,8], index: 8, kind: output, shape index: {1}]
  %9 = xla_tuple %s7, %s8
  %s10 = sld [smem:[#allocation0]]
  $region42: #{tpu_custom_call.1} parent=0
    _
  %s12 = ssub.s32 1, %s10
  %s13 = scalar_select 0, %s12, %s10
  %s15 = sshll.u32 %s0, 4
  %s16 = int_to_ptr.vmem [resolvable:$true] %s15
  %18 = dma.vmem_to_smem %s16, 16, [#allocation3], [#allocation2]
  %20 = dma.done [#allocation2], 16
  %21 = sfence
  $region1: #{tpu_custom_call.1} parent=0
    #allocation4 [shape = 'u8[8192]{0}', space=vmem, size = 0x2000, scoped, tag = 'output window, operand 0, single buffered']
    #allocation5 [shape = 's32[1]{0}', space=sflag, size = 0x4, scoped, tag = 'scoped memory for tpu_custom_call.1']
    #allocation6 [shape = 'u8[8192]{0}', space=vmem, size = 0x2000, scoped, tag = 'output window, operand 1, single buffered']
    #allocation7 [shape = 's32[1]{0}', space=sflag, size = 0x4, scoped, tag = 'scoped memory for tpu_custom_call.1']
    %22 = vsyncpa [#allocation5], 0
    %23 = vsyncpa [#allocation7], 0
    // Predicated region
    $region2: #{tpu_custom_call.1} parent=1 // pred_check
      _
    $region3: #{tpu_custom_call.1} parent=1 // pred_check_branch
      %25 = sbr.rel (0) target = $region5
    $region4: #{tpu_custom_call.1} parent=1 // pred_region
      _
    $region5: #{tpu_custom_call.1} parent=1 // pred_fallthru
      _
    // Predicated region
    $region6: #{tpu_custom_call.1} parent=1 // pred_check
      _
    $region7: #{tpu_custom_call.1} parent=1 // pred_check_branch
      %27 = sbr.rel (0) target = $region9
    $region8: #{tpu_custom_call.1} parent=1 // pred_region
      _
    $region9: #{tpu_custom_call.1} parent=1 // pred_fallthru
      _
    // Predicated region
    $region10: #{tpu_custom_call.1} parent=1 // pred_check
      _
    $region11: #{tpu_custom_call.1} parent=1 // pred_check_branch
      %29 = sbr.rel (0) target = $region13
    $region12: #{tpu_custom_call.1} parent=1 // pred_region
      _
    $region13: #{tpu_custom_call.1} parent=1 // pred_fallthru
      _
    // Predicated region
    $region14: #{tpu_custom_call.1} parent=1 // pred_check
      _
    $region15: #{tpu_custom_call.1} parent=1 // pred_check_branch
      %31 = sbr.rel (0) target = $region17
    $region16: #{tpu_custom_call.1} parent=1 // pred_region
      _
    $region17: #{tpu_custom_call.1} parent=1 // pred_fallthru
      _
    // Predicated region
    $region18: #{tpu_custom_call.1} parent=1 // pred_check
      _
    $region19: #{tpu_custom_call.1} parent=1 // pred_check_branch
      %33 = sbr.rel (0) target = $region21
    $region20: #{tpu_custom_call.1} parent=1 // pred_region
      _
    $region21: #{tpu_custom_call.1} parent=1 // pred_fallthru
      _
    // Predicated region
    $region22: #{tpu_custom_call.1} parent=1 // pred_check
      _
    $region23: #{tpu_custom_call.1} parent=1 // pred_check_branch
      %35 = sbr.rel (0) target = $region25
    $region24: #{tpu_custom_call.1} parent=1 // pred_region
      _
    $region25: #{tpu_custom_call.1} parent=1 // pred_fallthru
      _
    %v36 = vld [vmem:[%s6] sm:$0x1]
    %v37 = vld [vmem:[%s4] sm:$0x1]
    %v38 = vld [vmem:[%s1] sm:$0xff]
    %v39 = vld [vmem:[%s1 + $0x8] sm:$0xff]
    %v40 = vld [vmem:[%s3] sm:$0xff]
    %v41 = vld [vmem:[%s3 + $0x8] sm:$0xff]
    %v42 = vld [vmem:[%s3 + $0x10] sm:$0xff]
    %v43 = vld [vmem:[%s3 + $0x18] sm:$0xff]
    %v45 = vperm.slane %v37, 0
    %vm47 = vcmask 261120
    %v49 = vsel %vm47, %v38, 0
    %v52 = vsel %vm47, %v39, 0
    %54 = vmatpush.msra.mxu0 0.0
    %55 = vmatpush.msra.mxu0 0.0
    %56 = vmatpush.msra.mxu0 0.0
    %57 = vmatpush.msra.mxu0 0.0
    %58 = vmatpush.msra.mxu0 0.0
    %59 = vmatpush.msra.mxu0 0.0
    %60 = vmatpush.msra.mxu0 0.0
    %61 = vmatpush.msra.mxu0 0.0
    %62 = vmatpush.msra.mxu0 0.0
    %63 = vmatpush.msra.mxu0 0.0
    %64 = vmatpush.msra.mxu0 0.0
    %65 = vmatpush.msra.mxu0 0.0
    %66 = vmatpush.msra.mxu0 %v43
    %67 = vmatpush.msra.mxu0 %v42
    %68 = vmatpush.msra.mxu0 %v41
    %69 = vmatpush.msra.mxu0 %v40
    %70 = vmatmul.f32.gmra.mxu0 %v49
    %v71 = vpop.f32.mrf.mxu0
    %v72 = vadd.f32 %v45, %v71
    %73 = vmatmul.f32.gmra.mxu0 %v52
    %v74 = vpop.f32.mrf.mxu0
    %v75 = vadd.f32 %v45, %v74
    %76 = vdwg.mxu0
    %v77 = vld [vmem:[%s2] sm:$0xff]
    %v78 = vld [vmem:[%s5] sm:$0xff]
    %v79 = vld [vmem:[%s5 + $0x8] sm:$0xff]
    %v80 = vld [vmem:[%s5 + $0x10] sm:$0xff]
    %v81 = vld [vmem:[%s5 + $0x18] sm:$0xff]
    %v82 = vld [vmem:[%s5 + $0x20] sm:$0xff]
    %vm83 = vcmask 326656
    %v85 = vsel %vm83, %v77, 0
    %87 = vmatpush.msra.mxu0 0.0
    %88 = vmatpush.msra.mxu0 0.0
    %89 = vmatpush.msra.mxu0 0.0
    %90 = vmatpush.msra.mxu0 0.0
    %91 = vmatpush.msra.mxu0 0.0
    %92 = vmatpush.msra.mxu0 0.0
    %93 = vmatpush.msra.mxu0 0.0
    %94 = vmatpush.msra.mxu0 0.0
    %95 = vmatpush.msra.mxu0 0.0
    %96 = vmatpush.msra.mxu0 0.0
    %97 = vmatpush.msra.mxu0 0.0
    %98 = vmatpush.msra.mxu0 %v82
    %99 = vmatpush.msra.mxu0 %v81
    %100 = vmatpush.msra.mxu0 %v80
    %101 = vmatpush.msra.mxu0 %v79
    %102 = vmatpush.msra.mxu0 %v78
    %103 = vmatmul.f32.gmra.mxu0 %v85
    %v104 = vpop.f32.mrf.mxu0
    %v105 = vadd.f32 0.0, %v104
    %106 = vdwg.mxu0
    %v108 = vrot.slane %v72, 1
    %v109 = vrot.slane %v72, 2
    %v110 = vrot.slane %v72, 3
    %v111 = vrot.slane %v72, 4
    %v112 = vrot.slane %v72, 5
    %v113 = vrot.slane %v72, 6
    %v114 = vrot.slane %v72, 7
    %v115 = vperm.slane %v72, 0
    %v116 = vperm.slane %v108, 0
    %v117 = vperm.slane %v109, 0
    %v118 = vperm.slane %v110, 0
    %v119 = vperm.slane %v111, 0
    %v120 = vperm.slane %v112, 0
    %v121 = vperm.slane %v113, 0
    %v122 = vperm.slane %v114, 0
    %v131 = vadd.f32 %v115, %v105
    %v132 = vadd.f32 %v116, %v105
    %v133 = vadd.f32 %v117, %v105
    %v134 = vadd.f32 %v118, %v105
    %v135 = vadd.f32 %v119, %v105
    %v136 = vadd.f32 %v120, %v105
    %v137 = vadd.f32 %v121, %v105
    %v138 = vadd.f32 %v122, %v105
    %v139 = vtanh.pop %v131
    %v140 = vtanh.pop %v132
    %v141 = vtanh.pop %v133
    %v142 = vtanh.pop %v134
    %v143 = vtanh.pop %v135
    %v144 = vtanh.pop %v136
    %v145 = vtanh.pop %v137
    %v146 = vtanh.pop %v138
    %v148 = vperm.slane %v36, 0
    %v150 = vmul.f32 %v139, %v148
    %v151 = vmul.f32 %v140, %v148
    %v152 = vmul.f32 %v141, %v148
    %v153 = vmul.f32 %v142, %v148
    %v154 = vmul.f32 %v143, %v148
    %v155 = vmul.f32 %v144, %v148
    %v156 = vmul.f32 %v145, %v148
    %v157 = vmul.f32 %v146, %v148
    %v158 = vsel %vm47, %v150, 0.0
    %159 = vadd.xlane.f32.xlu0 %v158
    %v160 = vpop.xlane.xlu0 %159
    %v161 = vsel %vm47, %v151, 0.0
    %162 = vadd.xlane.f32.xlu0 %v161
    %v163 = vpop.xlane.xlu0 %162
    %v164 = vsel %vm47, %v152, 0.0
    %165 = vadd.xlane.f32.xlu0 %v164
    %v166 = vpop.xlane.xlu0 %165
    %v167 = vsel %vm47, %v153, 0.0
    %168 = vadd.xlane.f32.xlu0 %v167
    %v169 = vpop.xlane.xlu0 %168
    %v170 = vsel %vm47, %v154, 0.0
    %171 = vadd.xlane.f32.xlu0 %v170
    %v172 = vpop.xlane.xlu0 %171
    %v173 = vsel %vm47, %v155, 0.0
    %174 = vadd.xlane.f32.xlu0 %v173
    %v175 = vpop.xlane.xlu0 %174
    %v176 = vsel %vm47, %v156, 0.0
    %177 = vadd.xlane.f32.xlu0 %v176
    %v178 = vpop.xlane.xlu0 %177
    %v179 = vsel %vm47, %v157, 0.0
    %180 = vadd.xlane.f32.xlu0 %v179
    %v181 = vpop.xlane.xlu0 %180
    %v190 = vlaneseq
    %v191 = vand.u32 %v190, 127
    %v192 = vperm.slane %v160, %v191
    %v193 = vperm.slane %v163, %v191
    %v194 = vperm.slane %v166, %v191
    %v195 = vperm.slane %v169, %v191
    %v196 = vperm.slane %v172, %v191
    %v197 = vperm.slane %v175, %v191
    %v198 = vperm.slane %v178, %v191
    %v199 = vperm.slane %v181, %v191
    %vm200 = vcmask 1041409
    %v201 = vsel %vm200, %v193, %v192
    %vm202 = vcmask 1042434
    %v203 = vsel %vm202, %v194, %v201
    %vm204 = vcmask 1043459
    %v205 = vsel %vm204, %v195, %v203
    %vm206 = vcmask 1044484
    %v207 = vsel %vm206, %v196, %v205
    %vm208 = vcmask 1045509
    %v209 = vsel %vm208, %v197, %v207
    %vm210 = vcmask 1046534
    %v211 = vsel %vm210, %v198, %v209
    %vm212 = vcmask 1047559
    %v213 = vsel %vm212, %v199, %v211
    %vm215 = vcmask 64512
    %216 = vst.msk [vmem:[#allocation6] sm:$0xff] %vm215, %v213
    %v217 = vld [vmem:[#allocation6] sm:$0xff]
    %s218 = smul.u32 0, 2
    %s219 = sld [smem:[#allocation3 + %s218]]
    %v220 = vstv %s219
    %vm221 = vcmp.lt.s32.totalorder %v191, %v220
    %v222 = vsel %vm221, %v217, -inf
    %v223 = vsel %vm215, %v222, -inf
    %224 = vmax.xlane.f32.xlu0 %v223
    %v225 = vpop.xlane.xlu0 %224
    %v226 = vmax.f32 %v225, -1e+30
    %v227 = vsub.f32 %v222, %v226
    %v228 = vmul.f32 %v227, 1.442695
    %v229 = vpow.pop %v228
    %v230 = vsel %vm215, %v229, 0.0
    %231 = vadd.xlane.f32.xlu0 %v230
    %v232 = vpop.xlane.xlu0 %231
    %vm233 = vcmp.gt.f32.partialorder %v232, 0.0
    %v234 = vsel %vm233, %v232, 1.0
    %v235 = vrcp.pop %v234
    %v236 = vmul.f32 %v234, %v235
    %v237 = vsub.f32 1.0, %v236
    %v238 = vmul.f32 %v235, %v237
    %v239 = vadd.f32 %v235, %v238
    %vm240 = vweird.f32 %v234
    %vm241 = vweird.f32 %v235
    %vm242 = vmor %vm240, %vm241
    %v243 = vsel %vm242, %v235, %v239
    %v244 = vand.u32 2147483647, %v234
    %vm245 = vcmp.eq.f32.partialorder %v244, 8.507059e+37
    %v246 = vand.u32 %v234, 2147483648
    %v247 = vor.u32 1.1754944e-38, %v246
    %v248 = vsel %vm245, %v247, %v243
    %v249 = vmul.f32 %v229, %v248
    %250 = vst.msk [vmem:[#allocation6] sm:$0xff] %vm215, %v249
    %v251 = vld [vmem:[%s2] sm:$0xff]
    %v253 = vsel %vm215, %v249, 0
    %255 = vmatpush.msra.mxu0 0.0
    %256 = vmatpush.msra.mxu0 0.0
    %257 = vmatpush.msra.mxu0 0.0
    %258 = vmatpush.msra.mxu0 0.0
    %259 = vmatpush.msra.mxu0 0.0
    %260 = vmatpush.msra.mxu0 0.0
    %261 = vmatpush.msra.mxu0 0.0
    %262 = vmatpush.msra.mxu0 0.0
    %263 = vmatpush.msra.mxu0 0.0
    %264 = vmatpush.msra.mxu0 0.0
    %265 = vmatpush.msra.mxu0 0.0
    %266 = vmatpush.msra.mxu0 0.0
    %267 = vmatpush.msra.mxu0 0.0
    %268 = vmatpush.msra.mxu0 0.0
    %269 = vmatpush.msra.mxu0 0.0
    %270 = vmatpush.msra.mxu0 %v251
    %271 = vmatmul.f32.gmra.mxu0 %v253
    %v272 = vpop.f32.mrf.mxu0
    %v273 = vadd.f32 0.0, %v272
    %274 = vdwg.mxu0
    %275 = vst.msk [vmem:[#allocation4] sm:$0xff] %vm47, %v273
    %s276 = scalar_lea.vmem %s2, 8
    %v277 = vld [vmem:[%s276] sm:$0xff]
    %v278 = vld [vmem:[%s5] sm:$0xff]
    %v279 = vld [vmem:[%s5 + $0x8] sm:$0xff]
    %v280 = vld [vmem:[%s5 + $0x10] sm:$0xff]
    %v281 = vld [vmem:[%s5 + $0x18] sm:$0xff]
    %v282 = vld [vmem:[%s5 + $0x20] sm:$0xff]
    %v284 = vsel %vm83, %v277, 0
    %286 = vmatpush.msra.mxu0 0.0
    %287 = vmatpush.msra.mxu0 0.0
    %288 = vmatpush.msra.mxu0 0.0
    %289 = vmatpush.msra.mxu0 0.0
    %290 = vmatpush.msra.mxu0 0.0
    %291 = vmatpush.msra.mxu0 0.0
    %292 = vmatpush.msra.mxu0 0.0
    %293 = vmatpush.msra.mxu0 0.0
    %294 = vmatpush.msra.mxu0 0.0
    %295 = vmatpush.msra.mxu0 0.0
    %296 = vmatpush.msra.mxu0 0.0
    %297 = vmatpush.msra.mxu0 %v282
    %298 = vmatpush.msra.mxu0 %v281
    %299 = vmatpush.msra.mxu0 %v280
    %300 = vmatpush.msra.mxu0 %v279
    %301 = vmatpush.msra.mxu0 %v278
    %302 = vmatmul.f32.gmra.mxu0 %v284
    %v303 = vpop.f32.mrf.mxu0
    %v304 = vadd.f32 0.0, %v303
    %305 = vdwg.mxu0
    %v307 = vrot.slane %v75, 1
    %v308 = vrot.slane %v75, 2
    %v309 = vrot.slane %v75, 3
    %v310 = vrot.slane %v75, 4
    %v311 = vrot.slane %v75, 5
    %v312 = vrot.slane %v75, 6
    %v313 = vrot.slane %v75, 7
    %v314 = vperm.slane %v75, 0
    %v315 = vperm.slane %v307, 0
    %v316 = vperm.slane %v308, 0
    %v317 = vperm.slane %v309, 0
    %v318 = vperm.slane %v310, 0
    %v319 = vperm.slane %v311, 0
    %v320 = vperm.slane %v312, 0
    %v321 = vperm.slane %v313, 0
    %v330 = vadd.f32 %v314, %v304
    %v331 = vadd.f32 %v315, %v304
    %v332 = vadd.f32 %v316, %v304
    %v333 = vadd.f32 %v317, %v304
    %v334 = vadd.f32 %v318, %v304
    %v335 = vadd.f32 %v319, %v304
    %v336 = vadd.f32 %v320, %v304
    %v337 = vadd.f32 %v321, %v304
    %v338 = vtanh.pop %v330
    %v339 = vtanh.pop %v331
    %v340 = vtanh.pop %v332
    %v341 = vtanh.pop %v333
    %v342 = vtanh.pop %v334
    %v343 = vtanh.pop %v335
    %v344 = vtanh.pop %v336
    %v345 = vtanh.pop %v337
    %v346 = vmul.f32 %v338, %v148
    %v347 = vmul.f32 %v339, %v148
    %v348 = vmul.f32 %v340, %v148
    %v349 = vmul.f32 %v341, %v148
    %v350 = vmul.f32 %v342, %v148
    %v351 = vmul.f32 %v343, %v148
    %v352 = vmul.f32 %v344, %v148
    %v353 = vmul.f32 %v345, %v148
    %v354 = vsel %vm47, %v346, 0.0
    %355 = vadd.xlane.f32.xlu0 %v354
    %v356 = vpop.xlane.xlu0 %355
    %v357 = vsel %vm47, %v347, 0.0
    %358 = vadd.xlane.f32.xlu0 %v357
    %v359 = vpop.xlane.xlu0 %358
    %v360 = vsel %vm47, %v348, 0.0
    %361 = vadd.xlane.f32.xlu0 %v360
    %v362 = vpop.xlane.xlu0 %361
    %v363 = vsel %vm47, %v349, 0.0
    %364 = vadd.xlane.f32.xlu0 %v363
    %v365 = vpop.xlane.xlu0 %364
    %v366 = vsel %vm47, %v350, 0.0
    %367 = vadd.xlane.f32.xlu0 %v366
    %v368 = vpop.xlane.xlu0 %367
    %v369 = vsel %vm47, %v351, 0.0
    %370 = vadd.xlane.f32.xlu0 %v369
    %v371 = vpop.xlane.xlu0 %370
    %v372 = vsel %vm47, %v352, 0.0
    %373 = vadd.xlane.f32.xlu0 %v372
    %v374 = vpop.xlane.xlu0 %373
    %v375 = vsel %vm47, %v353, 0.0
    %376 = vadd.xlane.f32.xlu0 %v375
    %v377 = vpop.xlane.xlu0 %376
    %v386 = vperm.slane %v356, %v191
    %v387 = vperm.slane %v359, %v191
    %v388 = vperm.slane %v362, %v191
    %v389 = vperm.slane %v365, %v191
    %v390 = vperm.slane %v368, %v191
    %v391 = vperm.slane %v371, %v191
    %v392 = vperm.slane %v374, %v191
    %v393 = vperm.slane %v377, %v191
    %v394 = vsel %vm200, %v387, %v386
    %v395 = vsel %vm202, %v388, %v394
    %v396 = vsel %vm204, %v389, %v395
    %v397 = vsel %vm206, %v390, %v396
    %v398 = vsel %vm208, %v391, %v397
    %v399 = vsel %vm210, %v392, %v398
    %v400 = vsel %vm212, %v393, %v399
    %s402 = scalar_lea.vmem [#allocation6], 8
    %403 = vst.msk [vmem:[%s402] sm:$0xff] %vm215, %v400
    %v404 = vld [vmem:[%s402] sm:$0xff]
    %s405 = sadd.s32 %s218, 1
    %s406 = sld [smem:[#allocation3 + %s405]]
    %v407 = vstv %s406
    %vm408 = vcmp.lt.s32.totalorder %v191, %v407
    %v409 = vsel %vm408, %v404, -inf
    %v410 = vsel %vm215, %v409, -inf
    %411 = vmax.xlane.f32.xlu0 %v410
    %v412 = vpop.xlane.xlu0 %411
    %v413 = vmax.f32 %v412, -1e+30
    %v414 = vsub.f32 %v409, %v413
    %v415 = vmul.f32 %v414, 1.442695
    %v416 = vpow.pop %v415
    %v417 = vsel %vm215, %v416, 0.0
    %418 = vadd.xlane.f32.xlu0 %v417
    %v419 = vpop.xlane.xlu0 %418
    %vm420 = vcmp.gt.f32.partialorder %v419, 0.0
    %v421 = vsel %vm420, %v419, 1.0
    %v422 = vrcp.pop %v421
    %v423 = vmul.f32 %v421, %v422
    %v424 = vsub.f32 1.0, %v423
    %v425 = vmul.f32 %v422, %v424
    %v426 = vadd.f32 %v422, %v425
    %vm427 = vweird.f32 %v421
    %vm428 = vweird.f32 %v422
    %vm429 = vmor %vm427, %vm428
    %v430 = vsel %vm429, %v422, %v426
    %v431 = vand.u32 2147483647, %v421
    %vm432 = vcmp.eq.f32.partialorder %v431, 8.507059e+37
    %v433 = vand.u32 %v421, 2147483648
    %v434 = vor.u32 1.1754944e-38, %v433
    %v435 = vsel %vm432, %v434, %v430
    %v436 = vmul.f32 %v416, %v435
    %437 = vst.msk [vmem:[%s402] sm:$0xff] %vm215, %v436
    %v438 = vld [vmem:[%s276] sm:$0xff]
    %v440 = vsel %vm215, %v436, 0
    %442 = vmatpush.msra.mxu0 0.0
    %443 = vmatpush.msra.mxu0 0.0
    %444 = vmatpush.msra.mxu0 0.0
    %445 = vmatpush.msra.mxu0 0.0
    %446 = vmatpush.msra.mxu0 0.0
    %447 = vmatpush.msra.mxu0 0.0
    %448 = vmatpush.msra.mxu0 0.0
    %449 = vmatpush.msra.mxu0 0.0
    %450 = vmatpush.msra.mxu0 0.0
    %451 = vmatpush.msra.mxu0 0.0
    %452 = vmatpush.msra.mxu0 0.0
    %453 = vmatpush.msra.mxu0 0.0
    %454 = vmatpush.msra.mxu0 0.0
    %455 = vmatpush.msra.mxu0 0.0
    %456 = vmatpush.msra.mxu0 0.0
    %457 = vmatpush.msra.mxu0 %v438
    %458 = vmatmul.f32.gmra.mxu0 %v440
    %v459 = vpop.f32.mrf.mxu0
    %v460 = vadd.f32 0.0, %v459
    %461 = vdwg.mxu0
    %s462 = scalar_lea.vmem [#allocation4], 8
    %463 = vst.msk [vmem:[%s462] sm:$0xff] %vm47, %v460
    // Predicated region
    $region26: #{tpu_custom_call.1} parent=1 // pred_check
      _
    $region27: #{tpu_custom_call.1} parent=1 // pred_check_branch
      %465 = sbr.rel (0) target = $region29
    $region28: #{tpu_custom_call.1} parent=1 // pred_region
      %467 = vsyncadd [#allocation5], 0
      %s468 = sshll.u32 [#allocation4], 4
      %s469 = int_to_ptr.vmem [resolvable:$true] %s468
      %s470 = sshll.u32 %s7, 4
      %s471 = int_to_ptr.hbm [resolvable:$true] %s470
      %476 = dma.vmem_to_hbm [thread:$0]  %s469, 256, %s471, [#allocation5], 128, 128, 8
    $region29: #{tpu_custom_call.1} parent=1 // pred_fallthru
      _
    // Predicated region
    $region30: #{tpu_custom_call.1} parent=1 // pred_check
      _
    $region31: #{tpu_custom_call.1} parent=1 // pred_check_branch
      %478 = sbr.rel (0) target = $region33
    $region32: #{tpu_custom_call.1} parent=1 // pred_region
      %480 = vsyncadd [#allocation7], 0
      %s481 = sshll.u32 [#allocation6], 4
      %s482 = int_to_ptr.vmem [resolvable:$true] %s481
      %s483 = sshll.u32 %s8, 4
      %s484 = int_to_ptr.hbm [resolvable:$true] %s483
      %489 = dma.vmem_to_hbm [thread:$0]  %s482, 256, %s484, [#allocation7], 128, 128, 8
    $region33: #{tpu_custom_call.1} parent=1 // pred_fallthru
      _
    // Predicated region
    $region34: #{tpu_custom_call.1} parent=1 // pred_check
      _
    $region35: #{tpu_custom_call.1} parent=1 // pred_check_branch
      %491 = sbr.rel (0) target = $region37
    $region36: #{tpu_custom_call.1} parent=1 // pred_region
      %493 = dma.done [#allocation5], 256
    $region37: #{tpu_custom_call.1} parent=1 // pred_fallthru
      _
    // Predicated region
    $region38: #{tpu_custom_call.1} parent=1 // pred_check
      _
    $region39: #{tpu_custom_call.1} parent=1 // pred_check_branch
      %495 = sbr.rel (0) target = $region41
    $region40: #{tpu_custom_call.1} parent=1 // pred_region
      %497 = dma.done [#allocation7], 256
    $region41: #{tpu_custom_call.1} parent=1 // pred_fallthru
      _
    %498 = vsyncpa [#allocation5], 1
    %499 = vsyncpa [#allocation7], 1

</llo_original>
